<compile_context>
chip_gen: v7x
topology: tpu7x:2x2x1
jax: 0.10.0
libtpu: 0.0.40
codegen_flags: <defaults>
</compile_context>

<pallas_src>
import functools

import jax
import jax.numpy as jnp
from jax.experimental import pallas as pl
from jax.experimental.pallas import tpu as pltpu


_INV_SQRT2 = 0.7071067811865476
_HAS_BUFFERED = hasattr(pl, "Buffered")


def _gelu_exact(x):
    # PyTorch nn.GELU() default: 0.5 * x * (1 + erf(x / sqrt(2))), kept in f32.
    # TODO(synk): on v5e, if VALU saturates, jax.nn.gelu(approximate=True) routes through the EUP.
    return 0.5 * x * (1.0 + jax.lax.erf(x * _INV_SQRT2))


def _round_up(n, m):
    return ((n + m - 1) // m) * m


# ------------------------------- kernels ------------------------------------


def _resblock_kernel_proj(x_ref, w1_ref, b1_ref, w2_ref, b2_ref, wp_ref, bp_ref, o_ref):
    x = x_ref[...]                                                     # bf16 (tm, in_dim)
    # Main path first: only x stays live across the two matmuls + GELUs.
    h = jnp.dot(x, w1_ref[...], preferred_element_type=jnp.float32) + b1_ref[...]
    h = _gelu_exact(h)
    h = jnp.dot(h.astype(w2_ref.dtype), w2_ref[...],
                preferred_element_type=jnp.float32) + b2_ref[...]
    h = _gelu_exact(h)
    # Projection branch (in_dim != out_dim): bn_project already folded into wp/bp.
    identity = jnp.dot(x, wp_ref[...], preferred_element_type=jnp.float32) + bp_ref[...]
    o_ref[...] = _gelu_exact(h + identity).astype(o_ref.dtype)


def _resblock_kernel_noproj(x_ref, w1_ref, b1_ref, w2_ref, b2_ref, o_ref):
    x = x_ref[...]                                                     # bf16 (tm, dim)
    h = jnp.dot(x, w1_ref[...], preferred_element_type=jnp.float32) + b1_ref[...]
    h = _gelu_exact(h)
    h = jnp.dot(h.astype(w2_ref.dtype), w2_ref[...],
                preferred_element_type=jnp.float32) + b2_ref[...]
    h = _gelu_exact(h)
    o_ref[...] = _gelu_exact(h + x.astype(jnp.float32)).astype(o_ref.dtype)  # identity = x


# ------------------------------- wrapper ------------------------------------


def _const_spec(shape, full_map):
    """Grid-invariant operand: single-buffered if supported (the DMA only happens once)."""
    if _HAS_BUFFERED:
        try:
            return pl.BlockSpec(shape, full_map, pipeline_mode=pl.Buffered(1))
        except TypeError:
            pass
    return pl.BlockSpec(shape, full_map)


@functools.partial(jax.jit, static_argnames=("batch_tile", "compute_dtype", "out_dtype"))
def residual_block(x, params, *, batch_tile=None, compute_dtype=jnp.bfloat16,
                   out_dtype=jnp.bfloat16):
    """params: folded dict {w1,b1,w2,b2[,wp,bp]} from fold_params(); weights are (in, out) bf16."""
    B, in_dim = x.shape
    out_dim = params["w1"].shape[1]
    project = "wp" in params
    if not project:
        assert in_dim == out_dim, "identity skip path requires in_dim == out_dim"

    # --- batch tiling: one large tile; partial edge block handled by the cdiv grid ---
    if batch_tile is None:
        batch_tile = min(256, max(8, (B // 8) * 8))

    xc = x if x.dtype == compute_dtype else x.astype(compute_dtype)
    pad_rows = batch_tile - B if B < batch_tile else 0   # only for tiny B (< 8 rows)
    if pad_rows:
        xc = jnp.pad(xc, ((0, pad_rows), (0, 0)))
    Bk = B + pad_rows
    grid = (pl.cdiv(Bk, batch_tile),)

    cast_w = lambda a: a if a.dtype == compute_dtype else a.astype(compute_dtype)
    cast_b = lambda a: a if a.dtype == jnp.float32 else a.astype(jnp.float32)
    w1, w2 = cast_w(params["w1"]), cast_w(params["w2"])       # no-ops: folded as bf16 already
    b1, b2 = cast_b(params["b1"]), cast_b(params["b2"])

    row = lambda i: (i, 0)    # x / out: tiled along the batch axis
    full = lambda i: (0, 0)   # parameters: same full block every grid step

    args = [xc, w1, b1, w2, b2]
    in_specs = [
        pl.BlockSpec((batch_tile, in_dim), row),
        _const_spec(w1.shape, full),
        _const_spec(b1.shape, full),
        _const_spec(w2.shape, full),
        _const_spec(b2.shape, full),
    ]
    kernel = _resblock_kernel_noproj
    weight_bytes = w1.size * w1.dtype.itemsize + w2.size * w2.dtype.itemsize
    bias_bytes = (b1.size + b2.size) * 4
    flops = 2 * Bk * out_dim * (in_dim + out_dim)

    if project:
        wp, bp = cast_w(params["wp"]), cast_b(params["bp"])
        args += [wp, bp]
        in_specs += [_const_spec(wp.shape, full), _const_spec(bp.shape, full)]
        weight_bytes += wp.size * wp.dtype.itemsize
        bias_bytes += bp.size * 4
        flops += 2 * Bk * in_dim * out_dim
        kernel = _resblock_kernel_proj

    # VMEM budget: weights x buffer-count + pipelined x / out tiles + f32 intermediates + headroom.
    it_c = jnp.dtype(compute_dtype).itemsize
    it_o = jnp.dtype(out_dtype).itemsize
    wbuf = 1 if _HAS_BUFFERED else 2
    footprint = (weight_bytes * wbuf + bias_bytes * wbuf
                 + 2 * batch_tile * in_dim * it_c
                 + 2 * batch_tile * out_dim * it_o
                 + 2 * batch_tile * out_dim * 4)
    vmem_limit = int(min(56 * 2**20, max(32 * 2**20, int(footprint * 1.5))))

    bytes_accessed = (xc.size * it_c + weight_bytes + bias_bytes + Bk * out_dim * it_o)

    out = pl.pallas_call(
        kernel,
        out_shape=jax.ShapeDtypeStruct((Bk, out_dim), out_dtype),
        grid_spec=pltpu.PrefetchScalarGridSpec(
            num_scalar_prefetch=0,
            grid=grid,
            in_specs=in_specs,
            out_specs=pl.BlockSpec((batch_tile, out_dim), row),
        ),
        compiler_params=pltpu.CompilerParams(
            dimension_semantics=("parallel",),
            vmem_limit_bytes=vmem_limit,
        ),
        cost_estimate=pl.CostEstimate(
            flops=int(flops),
            transcendentals=int(3 * Bk * out_dim),
            bytes_accessed=int(bytes_accessed),
        ),
    )(*args)

    return out[:B] if pad_rows else out


# --------------------------- parameter helpers -------------------------------


def fold_params(raw, eps=1e-5, compute_dtype=jnp.bfloat16):
    """Fold eval-mode BatchNorm1d (running stats) into the preceding Linear (host side).

    Weights are stored transposed as (in_features, out_features) and pre-cast to `compute_dtype`
    once here (so the kernel never pays a per-call f32->bf16 HBM round trip); biases stay f32.
    y = x @ W' + b' with W' = W * scale and b' = b * scale + (beta - mean * scale).
    """
    def fold(w, b, bn):
        scale = bn["gamma"] / jnp.sqrt(bn["var"] + eps)        # (out,)
        w_f = (w * scale[None, :]).astype(compute_dtype)
        b_f = (b * scale + (bn["beta"] - bn["mean"] * scale)).reshape(1, -1).astype(jnp.float32)
        return w_f, b_f

    out = {}
    out["w1"], out["b1"] = fold(raw["w1"], raw["b1"], raw["bn1"])
    out["w2"], out["b2"] = fold(raw["w2"], raw["b2"], raw["bn2"])
    if "wp" in raw:
        out["wp"], out["bp"] = fold(raw["wp"], raw["bp"], raw["bn_project"])
    return out


def make_raw_params(key, in_dim, out_dim):
    """Deterministic synthetic parameters matching the PyTorch module's shapes (weights transposed)."""
    ks = jax.random.split(key, 9)
    f32 = jnp.float32

    def bn(k):
        kk = jax.random.split(k, 4)
        return dict(
            gamma=1.0 + 0.1 * jax.random.normal(kk[0], (out_dim,), f32),
            beta=0.1 * jax.random.normal(kk[1], (out_dim,), f32),
            mean=0.1 * jax.random.normal(kk[2], (out_dim,), f32),
            var=1.0 + 0.1 * jax.random.uniform(kk[3], (out_dim,), f32),
        )

    p = dict(
        w1=0.1 * jax.random.normal(ks[0], (in_dim, out_dim), f32),
        b1=0.05 * jax.random.normal(ks[1], (out_dim,), f32),
        w2=0.1 * jax.random.normal(ks[2], (out_dim, out_dim), f32),
        b2=0.05 * jax.random.normal(ks[3], (out_dim,), f32),
        bn1=bn(ks[4]),
        bn2=bn(ks[5]),
    )
    if in_dim != out_dim:
        p["wp"] = 0.1 * jax.random.normal(ks[6], (in_dim, out_dim), f32)
        p["bp"] = 0.05 * jax.random.normal(ks[7], (out_dim,), f32)
        p["bn_project"] = bn(ks[8])
    return p


def residual_block_ref(x, folded, *, compute_dtype=None):
    """Plain-JAX reference.  compute_dtype=jnp.bfloat16 mirrors the kernel's operand quantization."""
    f32 = jnp.float32
    if compute_dtype is None:
        cast = lambda a: a.astype(f32)
    else:
        cast = lambda a: a.astype(compute_dtype).astype(f32)
    xc = cast(x)
    h = _gelu_exact(xc @ cast(folded["w1"]) + folded["b1"].astype(f32))
    h = _gelu_exact(cast(h) @ cast(folded["w2"]) + folded["b2"].astype(f32))
    if "wp" in folded:
        identity = xc @ cast(folded["wp"]) + folded["bp"].astype(f32)
    else:
        identity = xc
    return _gelu_exact(h + identity)


# ---------------------------------- demo -------------------------------------


if __name__ == "__main__":
    key = jax.random.PRNGKey(0)
    kx1, kp1, kx2, kp2 = jax.random.split(key, 4)

    # Case 1: in_dim != out_dim -> projection + bn_project branch active.
    B, IN_DIM, OUT_DIM = 64, 32, 64
    x = jax.random.normal(kx1, (B, IN_DIM), jnp.float32)
    folded = fold_params(make_raw_params(kp1, IN_DIM, OUT_DIM))
    out = jax.block_until_ready(residual_block(x, folded))
    assert out.shape == (B, OUT_DIM)
    ref_strict = residual_block_ref(x, folded, compute_dtype=jnp.bfloat16)  # same quantization
    ref_f32 = residual_block_ref(x, folded)                                 # full-precision sanity
    assert jnp.allclose(out.astype(jnp.float32), ref_strict, atol=2e-2, rtol=2e-2), \
        "mismatch vs bf16-operand reference"
    assert jnp.allclose(out.astype(jnp.float32), ref_f32, atol=6e-2, rtol=6e-2), \
        "mismatch vs f32 reference"

    # Case 2: in_dim == out_dim -> identity skip path (no projection matmul), matching nn.Identity.
    B2, DIM = 32, 64
    x2 = jax.random.normal(kx2, (B2, DIM), jnp.float32)
    folded2 = fold_params(make_raw_params(kp2, DIM, DIM))
    out2 = jax.block_until_ready(residual_block(x2, folded2))
    assert out2.shape == (B2, DIM)
    ref2 = residual_block_ref(x2, folded2, compute_dtype=jnp.bfloat16)
    assert jnp.allclose(out2.astype(jnp.float32), ref2, atol=2e-2, rtol=2e-2), \
        "mismatch vs reference (identity path)"

    print("KERNEL_OK")
</pallas_src>

<mosaic_0001>
module attributes {stable_mosaic.version = 11 : i64} {
  func.func @_resblock_kernel_proj(%arg0: i32, %arg1: memref<64x32xbf16, #tpu.memory_space<vmem>>, %arg2: memref<32x64xbf16, #tpu.memory_space<vmem>>, %arg3: memref<1x64xf32, #tpu.memory_space<vmem>>, %arg4: memref<64x64xbf16, #tpu.memory_space<vmem>>, %arg5: memref<1x64xf32, #tpu.memory_space<vmem>>, %arg6: memref<32x64xbf16, #tpu.memory_space<vmem>>, %arg7: memref<1x64xf32, #tpu.memory_space<vmem>>, %arg8: memref<64x64xbf16, #tpu.memory_space<vmem>>) attributes {dimension_semantics = [#tpu.dimension_semantics<parallel>], iteration_bounds = array<i64: 1>, scalar_prefetch = 0 : i64, scratch_operands = 0 : i64, tpu.core_type = #tpu.core_type<tc>, window_params = [{transform_indices = @transform_0, window_bounds = array<i64: 64, 32>}, {pipeline_mode = #tpu.pipeline_mode<synchronous>, transform_indices = @transform_1, window_bounds = array<i64: 32, 64>}, {pipeline_mode = #tpu.pipeline_mode<synchronous>, transform_indices = @transform_2, window_bounds = array<i64: 1, 64>}, {pipeline_mode = #tpu.pipeline_mode<synchronous>, transform_indices = @transform_3, window_bounds = array<i64: 64, 64>}, {pipeline_mode = #tpu.pipeline_mode<synchronous>, transform_indices = @transform_4, window_bounds = array<i64: 1, 64>}, {pipeline_mode = #tpu.pipeline_mode<synchronous>, transform_indices = @transform_5, window_bounds = array<i64: 32, 64>}, {pipeline_mode = #tpu.pipeline_mode<synchronous>, transform_indices = @transform_6, window_bounds = array<i64: 1, 64>}, {transform_indices = @transform_7, window_bounds = array<i64: 64, 64>}]} {
    %c0 = arith.constant 0 : index
    %c0_0 = arith.constant 0 : index
    %0 = vector.load %arg1[%c0, %c0_0] : memref<64x32xbf16, #tpu.memory_space<vmem>>, vector<64x32xbf16>
    %c0_1 = arith.constant 0 : index
    %c0_2 = arith.constant 0 : index
    %1 = vector.load %arg2[%c0_1, %c0_2] : memref<32x64xbf16, #tpu.memory_space<vmem>>, vector<32x64xbf16>
    %cst = arith.constant dense<0.000000e+00> : vector<64x64xf32>
    %2 = tpu.matmul %0, %1, %cst {dimension_numbers = #tpu.dot_dimension_numbers<[1], [0], [0], [1], [0, 0, 1, 1], [], []>} : vector<64x32xbf16>, vector<32x64xbf16>, vector<64x64xf32> -> vector<64x64xf32>
    %c0_3 = arith.constant 0 : index
    %c0_4 = arith.constant 0 : index
    %3 = vector.load %arg3[%c0_3, %c0_4] : memref<1x64xf32, #tpu.memory_space<vmem>>, vector<1x64xf32>
    %4 = vector.broadcast %3 : vector<1x64xf32> to vector<64x64xf32>
    %5 = arith.addf %2, %4 : vector<64x64xf32>
    %cst_5 = arith.constant 5.000000e-01 : f32
    %6 = vector.broadcast %cst_5 : f32 to vector<64x64xf32>
    %7 = arith.mulf %6, %5 : vector<64x64xf32>
    %cst_6 = arith.constant 0.707106769 : f32
    %8 = vector.broadcast %cst_6 : f32 to vector<64x64xf32>
    %9 = arith.mulf %5, %8 : vector<64x64xf32>
    %10 = math.erf %9 : vector<64x64xf32>
    %cst_7 = arith.constant 1.000000e+00 : f32
    %11 = vector.broadcast %cst_7 : f32 to vector<64x64xf32>
    %12 = arith.addf %11, %10 : vector<64x64xf32>
    %13 = arith.mulf %7, %12 : vector<64x64xf32>
    %14 = arith.truncf %13 : vector<64x64xf32> to vector<64x64xbf16>
    %c0_8 = arith.constant 0 : index
    %c0_9 = arith.constant 0 : index
    %15 = vector.load %arg4[%c0_8, %c0_9] : memref<64x64xbf16, #tpu.memory_space<vmem>>, vector<64x64xbf16>
    %cst_10 = arith.constant dense<0.000000e+00> : vector<64x64xf32>
    %16 = tpu.matmul %14, %15, %cst_10 {dimension_numbers = #tpu.dot_dimension_numbers<[1], [0], [0], [1], [0, 0, 1, 1], [], []>} : vector<64x64xbf16>, vector<64x64xbf16>, vector<64x64xf32> -> vector<64x64xf32>
    %c0_11 = arith.constant 0 : index
    %c0_12 = arith.constant 0 : index
    %17 = vector.load %arg5[%c0_11, %c0_12] : memref<1x64xf32, #tpu.memory_space<vmem>>, vector<1x64xf32>
    %18 = vector.broadcast %17 : vector<1x64xf32> to vector<64x64xf32>
    %19 = arith.addf %16, %18 : vector<64x64xf32>
    %cst_13 = arith.constant 5.000000e-01 : f32
    %20 = vector.broadcast %cst_13 : f32 to vector<64x64xf32>
    %21 = arith.mulf %20, %19 : vector<64x64xf32>
    %cst_14 = arith.constant 0.707106769 : f32
    %22 = vector.broadcast %cst_14 : f32 to vector<64x64xf32>
    %23 = arith.mulf %19, %22 : vector<64x64xf32>
    %24 = math.erf %23 : vector<64x64xf32>
    %cst_15 = arith.constant 1.000000e+00 : f32
    %25 = vector.broadcast %cst_15 : f32 to vector<64x64xf32>
    %26 = arith.addf %25, %24 : vector<64x64xf32>
    %27 = arith.mulf %21, %26 : vector<64x64xf32>
    %c0_16 = arith.constant 0 : index
    %c0_17 = arith.constant 0 : index
    %28 = vector.load %arg6[%c0_16, %c0_17] : memref<32x64xbf16, #tpu.memory_space<vmem>>, vector<32x64xbf16>
    %cst_18 = arith.constant dense<0.000000e+00> : vector<64x64xf32>
    %29 = tpu.matmul %0, %28, %cst_18 {dimension_numbers = #tpu.dot_dimension_numbers<[1], [0], [0], [1], [0, 0, 1, 1], [], []>} : vector<64x32xbf16>, vector<32x64xbf16>, vector<64x64xf32> -> vector<64x64xf32>
    %c0_19 = arith.constant 0 : index
    %c0_20 = arith.constant 0 : index
    %30 = vector.load %arg7[%c0_19, %c0_20] : memref<1x64xf32, #tpu.memory_space<vmem>>, vector<1x64xf32>
    %31 = vector.broadcast %30 : vector<1x64xf32> to vector<64x64xf32>
    %32 = arith.addf %29, %31 : vector<64x64xf32>
    %33 = arith.addf %27, %32 : vector<64x64xf32>
    %cst_21 = arith.constant 5.000000e-01 : f32
    %34 = vector.broadcast %cst_21 : f32 to vector<64x64xf32>
    %35 = arith.mulf %34, %33 : vector<64x64xf32>
    %cst_22 = arith.constant 0.707106769 : f32
    %36 = vector.broadcast %cst_22 : f32 to vector<64x64xf32>
    %37 = arith.mulf %33, %36 : vector<64x64xf32>
    %38 = math.erf %37 : vector<64x64xf32>
    %cst_23 = arith.constant 1.000000e+00 : f32
    %39 = vector.broadcast %cst_23 : f32 to vector<64x64xf32>
    %40 = arith.addf %39, %38 : vector<64x64xf32>
    %41 = arith.mulf %35, %40 : vector<64x64xf32>
    %42 = arith.truncf %41 : vector<64x64xf32> to vector<64x64xbf16>
    %c0_24 = arith.constant 0 : index
    %c0_25 = arith.constant 0 : index
    %43 = vector.load %arg8[%c0_24, %c0_25] : memref<64x64xbf16, #tpu.memory_space<vmem>>, vector<64x64xbf16>
    tpu.vector_store %arg8[%c0_24, %c0_25], %42 {strides = array<i32>} : memref<64x64xbf16, #tpu.memory_space<vmem>>, vector<64x64xbf16>,
    return
  }
  func.func @transform_0(%arg0: i32) -> (i32, i32) {
    %c0_i32 = arith.constant 0 : i32
    %c0_i32_0 = arith.constant 0 : i32
    return %arg0, %c0_i32 : i32, i32
  }
  func.func @transform_1(%arg0: i32) -> (i32, i32) {
    %c0_i32 = arith.constant 0 : i32
    %c0_i32_0 = arith.constant 0 : i32
    %c0_i32_1 = arith.constant 0 : i32
    return %c0_i32, %c0_i32_0 : i32, i32
  }
  func.func @transform_2(%arg0: i32) -> (i32, i32) {
    %c0_i32 = arith.constant 0 : i32
    %c0_i32_0 = arith.constant 0 : i32
    %c0_i32_1 = arith.constant 0 : i32
    return %c0_i32, %c0_i32_0 : i32, i32
  }
  func.func @transform_3(%arg0: i32) -> (i32, i32) {
    %c0_i32 = arith.constant 0 : i32
    %c0_i32_0 = arith.constant 0 : i32
    %c0_i32_1 = arith.constant 0 : i32
    return %c0_i32, %c0_i32_0 : i32, i32
  }
  func.func @transform_4(%arg0: i32) -> (i32, i32) {
    %c0_i32 = arith.constant 0 : i32
    %c0_i32_0 = arith.constant 0 : i32
    %c0_i32_1 = arith.constant 0 : i32
    return %c0_i32, %c0_i32_0 : i32, i32
  }
  func.func @transform_5(%arg0: i32) -> (i32, i32) {
    %c0_i32 = arith.constant 0 : i32
    %c0_i32_0 = arith.constant 0 : i32
    %c0_i32_1 = arith.constant 0 : i32
    return %c0_i32, %c0_i32_0 : i32, i32
  }
  func.func @transform_6(%arg0: i32) -> (i32, i32) {
    %c0_i32 = arith.constant 0 : i32
    %c0_i32_0 = arith.constant 0 : i32
    %c0_i32_1 = arith.constant 0 : i32
    return %c0_i32, %c0_i32_0 : i32, i32
  }
  func.func @transform_7(%arg0: i32) -> (i32, i32) {
    %c0_i32 = arith.constant 0 : i32
    %c0_i32_0 = arith.constant 0 : i32
    return %arg0, %c0_i32 : i32, i32
  }
}

</mosaic_0001>

<llo_original>
// kernel: residual_block.1
$region0: #{residual_block.1}
  #allocation0 [shape = 'u32[]', space=smem, size = 0x4, offset = 0x4, fixed_abs, tag = 'smem constant byte address 0x4 - core index']
  #allocation1 [shape = 'u32[144,128]{1,0:T(1,128)}', space=vmem, size = 0x12000, scoped, tag = 'internal scratch']
  %s0 = inlined_call_operand.vmem [shape: bf16[64,32], index: 0, kind: input, shape index: {}]
  %s1 = inlined_call_operand.vmem [shape: bf16[32,64], index: 1, kind: input, shape index: {}]
  %s2 = inlined_call_operand.vmem [shape: f32[1,64], index: 2, kind: input, shape index: {}]
  %s3 = inlined_call_operand.vmem [shape: bf16[64,64], index: 3, kind: input, shape index: {}]
  %s4 = inlined_call_operand.vmem [shape: f32[1,64], index: 4, kind: input, shape index: {}]
  %s5 = inlined_call_operand.vmem [shape: bf16[32,64], index: 5, kind: input, shape index: {}]
  %s6 = inlined_call_operand.vmem [shape: f32[1,64], index: 6, kind: input, shape index: {}]
  %s7 = inlined_call_operand.hbm [shape: bf16[64,64], index: 7, kind: output, shape index: {}]
  %s8 = sld [smem:[#allocation0]]
  $region38: #{residual_block.1} parent=0
    _
  %s10 = ssub.s32 1, %s8
  %s11 = scalar_select 0, %s10, %s8
  $region1: #{residual_block.1} parent=0
    #allocation2 [shape = 'u8[16384]{0}', space=vmem, size = 0x4000, scoped, tag = 'output window, operand 0, single buffered']
    #allocation3 [shape = 's32[1]{0}', space=sflag, size = 0x4, scoped, tag = 'scoped memory for residual_block.1']
    %12 = vsyncpa [#allocation3], 0
    // Predicated region
    $region2: #{residual_block.1} parent=1 // pred_check
      _
    $region3: #{residual_block.1} parent=1 // pred_check_branch
      %14 = sbr.rel (0) target = $region5
    $region4: #{residual_block.1} parent=1 // pred_region
      _
    $region5: #{residual_block.1} parent=1 // pred_fallthru
      _
    // Predicated region
    $region6: #{residual_block.1} parent=1 // pred_check
      _
    $region7: #{residual_block.1} parent=1 // pred_check_branch
      %16 = sbr.rel (0) target = $region9
    $region8: #{residual_block.1} parent=1 // pred_region
      _
    $region9: #{residual_block.1} parent=1 // pred_fallthru
      _
    // Predicated region
    $region10: #{residual_block.1} parent=1 // pred_check
      _
    $region11: #{residual_block.1} parent=1 // pred_check_branch
      %18 = sbr.rel (0) target = $region13
    $region12: #{residual_block.1} parent=1 // pred_region
      _
    $region13: #{residual_block.1} parent=1 // pred_fallthru
      _
    // Predicated region
    $region14: #{residual_block.1} parent=1 // pred_check
      _
    $region15: #{residual_block.1} parent=1 // pred_check_branch
      %20 = sbr.rel (0) target = $region17
    $region16: #{residual_block.1} parent=1 // pred_region
      _
    $region17: #{residual_block.1} parent=1 // pred_fallthru
      _
    // Predicated region
    $region18: #{residual_block.1} parent=1 // pred_check
      _
    $region19: #{residual_block.1} parent=1 // pred_check_branch
      %22 = sbr.rel (0) target = $region21
    $region20: #{residual_block.1} parent=1 // pred_region
      _
    $region21: #{residual_block.1} parent=1 // pred_fallthru
      _
    // Predicated region
    $region22: #{residual_block.1} parent=1 // pred_check
      _
    $region23: #{residual_block.1} parent=1 // pred_check_branch
      %24 = sbr.rel (0) target = $region25
    $region24: #{residual_block.1} parent=1 // pred_region
      _
    $region25: #{residual_block.1} parent=1 // pred_fallthru
      _
    // Predicated region
    $region26: #{residual_block.1} parent=1 // pred_check
      _
    $region27: #{residual_block.1} parent=1 // pred_check_branch
      %26 = sbr.rel (0) target = $region29
    $region28: #{residual_block.1} parent=1 // pred_region
      _
    $region29: #{residual_block.1} parent=1 // pred_fallthru
      _
    %v28 = vld [vmem:[%s0] sm:$0xf]
    %v29 = vld [vmem:[%s0 + $0x4] sm:$0xf]
    %v30 = vld [vmem:[%s0 + $0x8] sm:$0xf]
    %v31 = vld [vmem:[%s0 + $0xc] sm:$0xf]
    %v32 = vld [vmem:[%s0 + $0x10] sm:$0xf]
    %v33 = vld [vmem:[%s0 + $0x14] sm:$0xf]
    %v34 = vld [vmem:[%s0 + $0x18] sm:$0xf]
    %v35 = vld [vmem:[%s0 + $0x1c] sm:$0xf]
    %v36 = vld [vmem:[%s1] sm:$0xf]
    %v37 = vld [vmem:[%s1 + $0x4] sm:$0xf]
    %v38 = vld [vmem:[%s1 + $0x8] sm:$0xf]
    %v39 = vld [vmem:[%s1 + $0xc] sm:$0xf]
    %v40 = vld [vmem:[%s2] sm:$0x1]
    %v42 = vlaneseq
    %v43 = vshrl.u32 %v42, 7
    %v44 = vsub.s32 0, %v43
    %v45 = vrot.slane %v40, %v44
    %v55 = vunpack.c.l.b16 %v28
    %v56 = vunpack.c.l.b16 %v29
    %v57 = vunpack.c.l.b16 %v30
    %v58 = vunpack.c.l.b16 %v31
    %v59 = vunpack.c.l.b16 %v32
    %v60 = vunpack.c.l.b16 %v33
    %v61 = vunpack.c.l.b16 %v34
    %v62 = vunpack.c.l.b16 %v35
    %v63 = vpack.c.b16 %v56, %v55
    %v64 = vpack.c.b16 %v58, %v57
    %v65 = vpack.c.b16 %v60, %v59
    %v66 = vpack.c.b16 %v62, %v61
    %v71 = vunpack.c.l.b16 %v36
    %v72 = vunpack.c.l.b16 %v37
    %v73 = vunpack.c.l.b16 %v38
    %v74 = vunpack.c.l.b16 %v39
    %v75 = vpack.c.b16 %v72, %v71
    %v76 = vpack.c.b16 %v74, %v73
    %vm79 = vcmask 261120
    %v81 = vsel %vm79, %v63, 0
    %v84 = vsel %vm79, %v64, 0
    %v87 = vsel %vm79, %v65, 0
    %v90 = vsel %vm79, %v66, 0
    %92 = vmatprep.subr.bf16.mxu0 0
    %93 = vmatpush1.bf16.msra.mxu0 %v75
    %94 = vmatprep.subr.bf16.mxu0 0
    %95 = vmatpush1.bf16.msra.mxu0 %v76
    %96 = vmatprep.subr.bf16.mxu0 0
    %97 = vmatpush1.bf16.msra.mxu0 0
    %98 = vmatprep.subr.bf16.mxu0 0
    %99 = vmatpush1.bf16.msra.mxu0 0
    %100 = vmatprep.subr.bf16.mxu0 0
    %101 = vmatpush1.bf16.msra.mxu0 0
    %102 = vmatprep.subr.bf16.mxu0 0
    %103 = vmatpush1.bf16.msra.mxu0 0
    %104 = vmatprep.subr.bf16.mxu0 0
    %105 = vmatpush1.bf16.msra.mxu0 0
    %106 = vmatprep.subr.bf16.mxu0 0
    %107 = vmatpush1.bf16.msra.mxu0 0
    %108 = vmatprep.subr.bf16.mxu0 0
    %109 = vmatpush1.bf16.msra.mxu0 0
    %110 = vmatprep.subr.bf16.mxu0 0
    %111 = vmatpush1.bf16.msra.mxu0 0
    %112 = vmatprep.subr.bf16.mxu0 0
    %113 = vmatpush1.bf16.msra.mxu0 0
    %114 = vmatprep.subr.bf16.mxu0 0
    %115 = vmatpush1.bf16.msra.mxu0 0
    %116 = vmatprep.subr.bf16.mxu0 0
    %117 = vmatpush1.bf16.msra.mxu0 0
    %118 = vmatprep.subr.bf16.mxu0 0
    %119 = vmatpush1.bf16.msra.mxu0 0
    %120 = vmatprep.subr.bf16.mxu0 0
    %121 = vmatpush1.bf16.msra.mxu0 0
    %122 = vmatprep.subr.bf16.mxu0 0
    %123 = vmatpush1.bf16.msra.mxu0 0
    %124 = vmatprep.mubr.bf16.mxu0 0
    %125 = vmatmul.mubr.bf16.gmra.mrb[0].mxu0 %v81
    %v126 = vpop.f32.mrb[0].mxu0
    %v127 = vadd.f32 %v45, %v126
    %v128 = vpop.f32.mrb[0].mxu0
    %v129 = vpop.f32.mrb[0].mxu0
    %v130 = vadd.f32 %v45, %v129
    %v131 = vpop.f32.mrb[0].mxu0
    %132 = vmatprep.mubr.bf16.mxu0 0
    %133 = vmatmul.mubr.bf16.gmra.mrb[0].mxu0 %v84
    %v134 = vpop.f32.mrb[0].mxu0
    %v135 = vadd.f32 %v45, %v134
    %v136 = vpop.f32.mrb[0].mxu0
    %v137 = vpop.f32.mrb[0].mxu0
    %v138 = vadd.f32 %v45, %v137
    %v139 = vpop.f32.mrb[0].mxu0
    %140 = vmatprep.mubr.bf16.mxu0 0
    %141 = vmatmul.mubr.bf16.gmra.mrb[0].mxu0 %v87
    %v142 = vpop.f32.mrb[0].mxu0
    %v143 = vadd.f32 %v45, %v142
    %v144 = vpop.f32.mrb[0].mxu0
    %v145 = vpop.f32.mrb[0].mxu0
    %v146 = vadd.f32 %v45, %v145
    %v147 = vpop.f32.mrb[0].mxu0
    %148 = vmatprep.mubr.bf16.mxu0 0
    %149 = vmatmul.mubr.bf16.gmra.mrb[0].mxu0 %v90
    %v150 = vpop.f32.mrb[0].mxu0
    %v151 = vadd.f32 %v45, %v150
    %v152 = vpop.f32.mrb[0].mxu0
    %v153 = vpop.f32.mrb[0].mxu0
    %v154 = vadd.f32 %v45, %v153
    %v155 = vpop.f32.mrb[0].mxu0
    %156 = vdwg.mxu0
    %v157 = vmul.f32 %v127, 0.5
    %v158 = vmul.f32 %v130, 0.5
    %v159 = vmul.f32 %v135, 0.5
    %v160 = vmul.f32 %v138, 0.5
    %v161 = vmul.f32 %v143, 0.5
    %v162 = vmul.f32 %v146, 0.5
    %v163 = vmul.f32 %v151, 0.5
    %v164 = vmul.f32 %v154, 0.5
    %v165 = vmul.f32 %v127, 0.70710677
    %v166 = vmul.f32 %v130, 0.70710677
    %v167 = vmul.f32 %v135, 0.70710677
    %v168 = vmul.f32 %v138, 0.70710677
    %v169 = vmul.f32 %v143, 0.70710677
    %v170 = vmul.f32 %v146, 0.70710677
    %v171 = vmul.f32 %v151, 0.70710677
    %v172 = vmul.f32 %v154, 0.70710677
    %v173 = verf.f32.pop %v165
    %v174 = verf.f32.pop %v166
    %v175 = verf.f32.pop %v167
    %v176 = verf.f32.pop %v168
    %v177 = verf.f32.pop %v169
    %v178 = verf.f32.pop %v170
    %v179 = verf.f32.pop %v171
    %v180 = verf.f32.pop %v172
    %v181 = vadd.f32 %v173, 1.0
    %v182 = vadd.f32 %v174, 1.0
    %v183 = vadd.f32 %v175, 1.0
    %v184 = vadd.f32 %v176, 1.0
    %v185 = vadd.f32 %v177, 1.0
    %v186 = vadd.f32 %v178, 1.0
    %v187 = vadd.f32 %v179, 1.0
    %v188 = vadd.f32 %v180, 1.0
    %v189 = vmul.f32 %v157, %v181
    %v190 = vmul.f32 %v158, %v182
    %v191 = vmul.f32 %v159, %v183
    %v192 = vmul.f32 %v160, %v184
    %v193 = vmul.f32 %v161, %v185
    %v194 = vmul.f32 %v162, %v186
    %v195 = vmul.f32 %v163, %v187
    %v196 = vmul.f32 %v164, %v188
    %v197 = vpack.c.bf16 %v190, %v189
    %v198 = vpack.c.bf16 %v192, %v191
    %v199 = vpack.c.bf16 %v194, %v193
    %v200 = vpack.c.bf16 %v196, %v195
    %v201 = vld [vmem:[%s3] sm:$0xf]
    %v202 = vld [vmem:[%s3 + $0x4] sm:$0xf]
    %v203 = vld [vmem:[%s3 + $0x8] sm:$0xf]
    %v204 = vld [vmem:[%s3 + $0xc] sm:$0xf]
    %v205 = vld [vmem:[%s3 + $0x10] sm:$0xf]
    %v206 = vld [vmem:[%s3 + $0x14] sm:$0xf]
    %v207 = vld [vmem:[%s3 + $0x18] sm:$0xf]
    %v208 = vld [vmem:[%s3 + $0x1c] sm:$0xf]
    %v209 = vld [vmem:[%s4] sm:$0x1]
    %v211 = vlaneseq
    %v212 = vshrl.u32 %v211, 7
    %v213 = vsub.s32 0, %v212
    %v214 = vrot.slane %v209, %v213
    %v224 = vunpack.c.l.b16 %v201
    %v225 = vunpack.c.l.b16 %v202
    %v226 = vunpack.c.l.b16 %v203
    %v227 = vunpack.c.l.b16 %v204
    %v228 = vunpack.c.l.b16 %v205
    %v229 = vunpack.c.l.b16 %v206
    %v230 = vunpack.c.l.b16 %v207
    %v231 = vunpack.c.l.b16 %v208
    %v232 = vpack.c.b16 %v225, %v224
    %v233 = vpack.c.b16 %v227, %v226
    %v234 = vpack.c.b16 %v229, %v228
    %v235 = vpack.c.b16 %v231, %v230
    %vm240 = vcmask 523264
    %v242 = vsel %vm240, %v197, 0
    %v245 = vsel %vm240, %v198, 0
    %v248 = vsel %vm240, %v199, 0
    %v251 = vsel %vm240, %v200, 0
    %253 = vmatprep.subr.bf16.mxu0 0
    %254 = vmatpush1.bf16.msra.mxu0 %v232
    %255 = vmatprep.subr.bf16.mxu0 0
    %256 = vmatpush1.bf16.msra.mxu0 %v233
    %257 = vmatprep.subr.bf16.mxu0 0
    %258 = vmatpush1.bf16.msra.mxu0 %v234
    %259 = vmatprep.subr.bf16.mxu0 0
    %260 = vmatpush1.bf16.msra.mxu0 %v235
    %261 = vmatprep.subr.bf16.mxu0 0
    %262 = vmatpush1.bf16.msra.mxu0 0
    %263 = vmatprep.subr.bf16.mxu0 0
    %264 = vmatpush1.bf16.msra.mxu0 0
    %265 = vmatprep.subr.bf16.mxu0 0
    %266 = vmatpush1.bf16.msra.mxu0 0
    %267 = vmatprep.subr.bf16.mxu0 0
    %268 = vmatpush1.bf16.msra.mxu0 0
    %269 = vmatprep.subr.bf16.mxu0 0
    %270 = vmatpush1.bf16.msra.mxu0 0
    %271 = vmatprep.subr.bf16.mxu0 0
    %272 = vmatpush1.bf16.msra.mxu0 0
    %273 = vmatprep.subr.bf16.mxu0 0
    %274 = vmatpush1.bf16.msra.mxu0 0
    %275 = vmatprep.subr.bf16.mxu0 0
    %276 = vmatpush1.bf16.msra.mxu0 0
    %277 = vmatprep.subr.bf16.mxu0 0
    %278 = vmatpush1.bf16.msra.mxu0 0
    %279 = vmatprep.subr.bf16.mxu0 0
    %280 = vmatpush1.bf16.msra.mxu0 0
    %281 = vmatprep.subr.bf16.mxu0 0
    %282 = vmatpush1.bf16.msra.mxu0 0
    %283 = vmatprep.subr.bf16.mxu0 0
    %284 = vmatpush1.bf16.msra.mxu0 0
    %285 = vmatprep.mubr.bf16.mxu0 0
    %286 = vmatmul.mubr.bf16.gmra.mrb[0].mxu0 %v242
    %v287 = vpop.f32.mrb[0].mxu0
    %v288 = vadd.f32 %v214, %v287
    %v289 = vpop.f32.mrb[0].mxu0
    %v290 = vpop.f32.mrb[0].mxu0
    %v291 = vadd.f32 %v214, %v290
    %v292 = vpop.f32.mrb[0].mxu0
    %293 = vmatprep.mubr.bf16.mxu0 0
    %294 = vmatmul.mubr.bf16.gmra.mrb[0].mxu0 %v245
    %v295 = vpop.f32.mrb[0].mxu0
    %v296 = vadd.f32 %v214, %v295
    %v297 = vpop.f32.mrb[0].mxu0
    %v298 = vpop.f32.mrb[0].mxu0
    %v299 = vadd.f32 %v214, %v298
    %v300 = vpop.f32.mrb[0].mxu0
    %301 = vmatprep.mubr.bf16.mxu0 0
    %302 = vmatmul.mubr.bf16.gmra.mrb[0].mxu0 %v248
    %v303 = vpop.f32.mrb[0].mxu0
    %v304 = vadd.f32 %v214, %v303
    %v305 = vpop.f32.mrb[0].mxu0
    %v306 = vpop.f32.mrb[0].mxu0
    %v307 = vadd.f32 %v214, %v306
    %v308 = vpop.f32.mrb[0].mxu0
    %309 = vmatprep.mubr.bf16.mxu0 0
    %310 = vmatmul.mubr.bf16.gmra.mrb[0].mxu0 %v251
    %v311 = vpop.f32.mrb[0].mxu0
    %v312 = vadd.f32 %v214, %v311
    %v313 = vpop.f32.mrb[0].mxu0
    %v314 = vpop.f32.mrb[0].mxu0
    %v315 = vadd.f32 %v214, %v314
    %v316 = vpop.f32.mrb[0].mxu0
    %317 = vdwg.mxu0
    %v318 = vmul.f32 %v288, 0.5
    %v319 = vmul.f32 %v291, 0.5
    %v320 = vmul.f32 %v296, 0.5
    %v321 = vmul.f32 %v299, 0.5
    %v322 = vmul.f32 %v304, 0.5
    %v323 = vmul.f32 %v307, 0.5
    %v324 = vmul.f32 %v312, 0.5
    %v325 = vmul.f32 %v315, 0.5
    %v326 = vmul.f32 %v288, 0.70710677
    %v327 = vmul.f32 %v291, 0.70710677
    %v328 = vmul.f32 %v296, 0.70710677
    %v329 = vmul.f32 %v299, 0.70710677
    %v330 = vmul.f32 %v304, 0.70710677
    %v331 = vmul.f32 %v307, 0.70710677
    %v332 = vmul.f32 %v312, 0.70710677
    %v333 = vmul.f32 %v315, 0.70710677
    %v334 = verf.f32.pop %v326
    %v335 = verf.f32.pop %v327
    %v336 = verf.f32.pop %v328
    %v337 = verf.f32.pop %v329
    %v338 = verf.f32.pop %v330
    %v339 = verf.f32.pop %v331
    %v340 = verf.f32.pop %v332
    %v341 = verf.f32.pop %v333
    %v342 = vadd.f32 %v334, 1.0
    %v343 = vadd.f32 %v335, 1.0
    %v344 = vadd.f32 %v336, 1.0
    %v345 = vadd.f32 %v337, 1.0
    %v346 = vadd.f32 %v338, 1.0
    %v347 = vadd.f32 %v339, 1.0
    %v348 = vadd.f32 %v340, 1.0
    %v349 = vadd.f32 %v341, 1.0
    %v350 = vmul.f32 %v318, %v342
    %v351 = vmul.f32 %v319, %v343
    %v352 = vmul.f32 %v320, %v344
    %v353 = vmul.f32 %v321, %v345
    %v354 = vmul.f32 %v322, %v346
    %v355 = vmul.f32 %v323, %v347
    %v356 = vmul.f32 %v324, %v348
    %v357 = vmul.f32 %v325, %v349
    %v358 = vld [vmem:[%s5] sm:$0xf]
    %v359 = vld [vmem:[%s5 + $0x4] sm:$0xf]
    %v360 = vld [vmem:[%s5 + $0x8] sm:$0xf]
    %v361 = vld [vmem:[%s5 + $0xc] sm:$0xf]
    %v362 = vld [vmem:[%s6] sm:$0x1]
    %v364 = vlaneseq
    %v365 = vshrl.u32 %v364, 7
    %v366 = vsub.s32 0, %v365
    %v367 = vrot.slane %v362, %v366
    %v373 = vunpack.c.l.b16 %v358
    %v374 = vunpack.c.l.b16 %v359
    %v375 = vunpack.c.l.b16 %v360
    %v376 = vunpack.c.l.b16 %v361
    %v377 = vpack.c.b16 %v374, %v373
    %v378 = vpack.c.b16 %v376, %v375
    %381 = vmatprep.subr.bf16.mxu0 0
    %382 = vmatpush1.bf16.msra.mxu0 %v377
    %383 = vmatprep.subr.bf16.mxu0 0
    %384 = vmatpush1.bf16.msra.mxu0 %v378
    %385 = vmatprep.subr.bf16.mxu0 0
    %386 = vmatpush1.bf16.msra.mxu0 0
    %387 = vmatprep.subr.bf16.mxu0 0
    %388 = vmatpush1.bf16.msra.mxu0 0
    %389 = vmatprep.subr.bf16.mxu0 0
    %390 = vmatpush1.bf16.msra.mxu0 0
    %391 = vmatprep.subr.bf16.mxu0 0
    %392 = vmatpush1.bf16.msra.mxu0 0
    %393 = vmatprep.subr.bf16.mxu0 0
    %394 = vmatpush1.bf16.msra.mxu0 0
    %395 = vmatprep.subr.bf16.mxu0 0
    %396 = vmatpush1.bf16.msra.mxu0 0
    %397 = vmatprep.subr.bf16.mxu0 0
    %398 = vmatpush1.bf16.msra.mxu0 0
    %399 = vmatprep.subr.bf16.mxu0 0
    %400 = vmatpush1.bf16.msra.mxu0 0
    %401 = vmatprep.subr.bf16.mxu0 0
    %402 = vmatpush1.bf16.msra.mxu0 0
    %403 = vmatprep.subr.bf16.mxu0 0
    %404 = vmatpush1.bf16.msra.mxu0 0
    %405 = vmatprep.subr.bf16.mxu0 0
    %406 = vmatpush1.bf16.msra.mxu0 0
    %407 = vmatprep.subr.bf16.mxu0 0
    %408 = vmatpush1.bf16.msra.mxu0 0
    %409 = vmatprep.subr.bf16.mxu0 0
    %410 = vmatpush1.bf16.msra.mxu0 0
    %411 = vmatprep.subr.bf16.mxu0 0
    %412 = vmatpush1.bf16.msra.mxu0 0
    %413 = vmatprep.mubr.bf16.mxu0 0
    %414 = vmatmul.mubr.bf16.gmra.mrb[0].mxu0 %v81
    %v415 = vpop.f32.mrb[0].mxu0
    %v416 = vadd.f32 %v367, %v415
    %v417 = vpop.f32.mrb[0].mxu0
    %v418 = vpop.f32.mrb[0].mxu0
    %v419 = vadd.f32 %v367, %v418
    %v420 = vpop.f32.mrb[0].mxu0
    %421 = vmatprep.mubr.bf16.mxu0 0
    %422 = vmatmul.mubr.bf16.gmra.mrb[0].mxu0 %v84
    %v423 = vpop.f32.mrb[0].mxu0
    %v424 = vadd.f32 %v367, %v423
    %v425 = vpop.f32.mrb[0].mxu0
    %v426 = vpop.f32.mrb[0].mxu0
    %v427 = vadd.f32 %v367, %v426
    %v428 = vpop.f32.mrb[0].mxu0
    %429 = vmatprep.mubr.bf16.mxu0 0
    %430 = vmatmul.mubr.bf16.gmra.mrb[0].mxu0 %v87
    %v431 = vpop.f32.mrb[0].mxu0
    %v432 = vadd.f32 %v367, %v431
    %v433 = vpop.f32.mrb[0].mxu0
    %v434 = vpop.f32.mrb[0].mxu0
    %v435 = vadd.f32 %v367, %v434
    %v436 = vpop.f32.mrb[0].mxu0
    %437 = vmatprep.mubr.bf16.mxu0 0
    %438 = vmatmul.mubr.bf16.gmra.mrb[0].mxu0 %v90
    %v439 = vpop.f32.mrb[0].mxu0
    %v440 = vadd.f32 %v367, %v439
    %v441 = vpop.f32.mrb[0].mxu0
    %v442 = vpop.f32.mrb[0].mxu0
    %v443 = vadd.f32 %v367, %v442
    %v444 = vpop.f32.mrb[0].mxu0
    %445 = vdwg.mxu0
    %v446 = vadd.f32 %v350, %v416
    %v447 = vadd.f32 %v351, %v419
    %v448 = vadd.f32 %v352, %v424
    %v449 = vadd.f32 %v353, %v427
    %v450 = vadd.f32 %v354, %v432
    %v451 = vadd.f32 %v355, %v435
    %v452 = vadd.f32 %v356, %v440
    %v453 = vadd.f32 %v357, %v443
    %v454 = vmul.f32 %v446, 0.5
    %v455 = vmul.f32 %v447, 0.5
    %v456 = vmul.f32 %v448, 0.5
    %v457 = vmul.f32 %v449, 0.5
    %v458 = vmul.f32 %v450, 0.5
    %v459 = vmul.f32 %v451, 0.5
    %v460 = vmul.f32 %v452, 0.5
    %v461 = vmul.f32 %v453, 0.5
    %v462 = vmul.f32 %v446, 0.70710677
    %v463 = vmul.f32 %v447, 0.70710677
    %v464 = vmul.f32 %v448, 0.70710677
    %v465 = vmul.f32 %v449, 0.70710677
    %v466 = vmul.f32 %v450, 0.70710677
    %v467 = vmul.f32 %v451, 0.70710677
    %v468 = vmul.f32 %v452, 0.70710677
    %v469 = vmul.f32 %v453, 0.70710677
    %v470 = verf.f32.pop %v462
    %v471 = verf.f32.pop %v463
    %v472 = verf.f32.pop %v464
    %v473 = verf.f32.pop %v465
    %v474 = verf.f32.pop %v466
    %v475 = verf.f32.pop %v467
    %v476 = verf.f32.pop %v468
    %v477 = verf.f32.pop %v469
    %v478 = vadd.f32 %v470, 1.0
    %v479 = vadd.f32 %v471, 1.0
    %v480 = vadd.f32 %v472, 1.0
    %v481 = vadd.f32 %v473, 1.0
    %v482 = vadd.f32 %v474, 1.0
    %v483 = vadd.f32 %v475, 1.0
    %v484 = vadd.f32 %v476, 1.0
    %v485 = vadd.f32 %v477, 1.0
    %v486 = vmul.f32 %v454, %v478
    %v487 = vmul.f32 %v455, %v479
    %v488 = vmul.f32 %v456, %v480
    %v489 = vmul.f32 %v457, %v481
    %v490 = vmul.f32 %v458, %v482
    %v491 = vmul.f32 %v459, %v483
    %v492 = vmul.f32 %v460, %v484
    %v493 = vmul.f32 %v461, %v485
    %v494 = vpack.c.bf16 %v487, %v486
    %v495 = vpack.c.bf16 %v489, %v488
    %v496 = vpack.c.bf16 %v491, %v490
    %v497 = vpack.c.bf16 %v493, %v492
    %v502 = vunpack.c.l.b16 %v494
    %v503 = vunpack.c.h.b16 %v494
    %v504 = vunpack.c.l.b16 %v495
    %v505 = vunpack.c.h.b16 %v495
    %v506 = vunpack.c.l.b16 %v496
    %v507 = vunpack.c.h.b16 %v496
    %v508 = vunpack.c.l.b16 %v497
    %v509 = vunpack.c.h.b16 %v497
    %v510 = vpack.c.b16 %v502, %v502
    %v511 = vpack.c.b16 %v503, %v503
    %v512 = vpack.c.b16 %v504, %v504
    %v513 = vpack.c.b16 %v505, %v505
    %v514 = vpack.c.b16 %v506, %v506
    %v515 = vpack.c.b16 %v507, %v507
    %v516 = vpack.c.b16 %v508, %v508
    %v517 = vpack.c.b16 %v509, %v509
    %vm526 = vcmask 519168
    %527 = vst.msk [vmem:[#allocation2] sm:$0xf] %vm526, %v510
    %528 = vst.msk [vmem:[#allocation2 + $0x4] sm:$0xf] %vm526, %v511
    %529 = vst.msk [vmem:[#allocation2 + $0x8] sm:$0xf] %vm526, %v512
    %530 = vst.msk [vmem:[#allocation2 + $0xc] sm:$0xf] %vm526, %v513
    %531 = vst.msk [vmem:[#allocation2 + $0x10] sm:$0xf] %vm526, %v514
    %532 = vst.msk [vmem:[#allocation2 + $0x14] sm:$0xf] %vm526, %v515
    %533 = vst.msk [vmem:[#allocation2 + $0x18] sm:$0xf] %vm526, %v516
    %534 = vst.msk [vmem:[#allocation2 + $0x1c] sm:$0xf] %vm526, %v517
    // Predicated region
    $region30: #{residual_block.1} parent=1 // pred_check
      _
    $region31: #{residual_block.1} parent=1 // pred_check_branch
      %536 = sbr.rel (0) target = $region33
    $region32: #{residual_block.1} parent=1 // pred_region
      %s538 = ssub.s32 512, 512
      %539 = vsyncadd [#allocation3], %s538
      %s540 = sshll.u32 [#allocation2], 4
      %s541 = int_to_ptr.vmem [resolvable:$true] %s540
      %546 = dma.vmem_to_hbm [thread:$0]  %s541, 512, %s7, [#allocation3], 64, 64, 4
    $region33: #{residual_block.1} parent=1 // pred_fallthru
      _
    // Predicated region
    $region34: #{residual_block.1} parent=1 // pred_check
      _
    $region35: #{residual_block.1} parent=1 // pred_check_branch
      %548 = sbr.rel (0) target = $region37
    $region36: #{residual_block.1} parent=1 // pred_region
      %549 = dma.done [#allocation3], 512
    $region37: #{residual_block.1} parent=1 // pred_fallthru
      _
    %550 = vsyncpa [#allocation3], 1

</llo_original>
